<compile_context>
chip_gen: v6e
topology: v6e:2x2x1
jax: 0.10.0
libtpu: 0.0.40
codegen_flags: <defaults>
</compile_context>

<pallas_src>
import functools

import jax
import jax.numpy as jnp
import numpy as np
from jax import lax
from jax.experimental import pallas as pl
from jax.experimental.pallas import tpu as pltpu  # noqa: F401  (TPU backend)


# --------------------------------------------------------------------------
# Pallas kernel: lane-dense transposed GEMM + bias (full padded accumulator)
# --------------------------------------------------------------------------
def _conv_gemm_kernel(patches_ref, w_ref, b_ref, out_ref):
    # patches_ref: (K_pad, M)       K_pad = Cin_pad*KH*KW (mult. of 8), M = N*OH*OW
    # w_ref:       (Cout_pad, K_pad)
    # b_ref:       (Cout_pad, 1)    zero-padded bias
    # out_ref:     (Cout_pad, M)    full 8-sublane, lane-dense output
    out_ref[...] = jnp.dot(w_ref[...], patches_ref[...],
                           preferred_element_type=jnp.float32) + b_ref[...]


@functools.partial(jax.jit, static_argnames=("stride", "padding", "dilation"))
def conv2d_pallas(x, w, b, *, stride=3, padding=3, dilation=1):
    """x: (N, Cin, H, W) f32; w: (Cout, Cin, KH, KW) f32; b: (Cout,) f32."""
    N, Cin, H, W = x.shape
    Cout, _, KH, KW = w.shape

    # non-overlapping-tap formulation requires stride == kernel, dilation == 1
    assert dilation == 1 and stride == KH == KW

    OH = (H + 2 * padding - dilation * (KH - 1) - 1) // stride + 1
    OW = (W + 2 * padding - dilation * (KW - 1) - 1) // stride + 1

    # Pad channels to a sublane multiple so K_pad = Cin_pad*KH*KW is a
    # multiple of 8; pad Cout to 8 so the kernel stores full vreg sublanes
    # (unmasked stores); the extra rows are sliced off on the host (fuses
    # under jit).
    cin_pad = ((Cin + 7) // 8) * 8
    cout_pad = ((Cout + 7) // 8) * 8
    K_pad = cin_pad * KH * KW
    M = N * OH * OW

    # Spatial padding sized so the padded extent is exactly stride*OH / stride*OW
    # (rows/cols beyond that are never read by the conv).
    pad_h_hi = stride * OH - H - padding
    pad_w_hi = stride * OW - W - padding
    assert pad_h_hi >= 0 and pad_w_hi >= 0

    # ---- glue (fuses under jit): one pad + one pure permutation ----------
    x_p = jnp.pad(
        x, ((0, 0), (0, cin_pad - Cin), (padding, pad_h_hi), (padding, pad_w_hi)))
    # (N, Cin_pad, OH*KH, OW*KW) -> (N, Cin_pad, OH, KH, OW, KW)
    x_r = x_p.reshape(N, cin_pad, OH, KH, OW, KW)
    # -> (Cin_pad, KH, KW, N, OH, OW) -> (K_pad, M)
    patches_T = x_r.transpose(1, 3, 5, 0, 2, 4).reshape(K_pad, M)

    # weight (Cout, Cin, KH, KW) -> zero-padded (Cout_pad, K_pad), K order (cin, kh, kw)
    w_r = w.reshape(Cout, Cin, KH * KW)
    w_mat = jnp.pad(w_r, ((0, cout_pad - Cout), (0, cin_pad - Cin), (0, 0))
                    ).reshape(cout_pad, K_pad)
    # bias zero-padded to the full 8-row accumulator
    b_mat = jnp.pad(b, (0, cout_pad - Cout)).reshape(cout_pad, 1)

    # ---- hot path: single gridless pallas_call (everything fits in VMEM) ----
    out_mat = pl.pallas_call(
        _conv_gemm_kernel,
        out_shape=jax.ShapeDtypeStruct((cout_pad, M), jnp.float32),
        # grid = (): whole arrays load as single VMEM blocks (~100 KB total);
        # tiling would only add ~0.35 us/step overhead at these shapes.
        cost_estimate=pl.CostEstimate(
            flops=2 * cout_pad * K_pad * M,
            bytes_accessed=(K_pad * M + cout_pad * K_pad
                            + cout_pad + cout_pad * M) * 4,
            transcendentals=0,
        ),
    )(patches_T, w_mat, b_mat)

    # (Cout_pad, N*OH*OW) -> slice padded rows -> NCHW.
    # For N == 1 this is a pure reshape (no transpose); all of it fuses under jit.
    out_c = out_mat[:Cout]
    if N == 1:
        out = out_c.reshape(1, Cout, OH, OW)
    else:
        out = out_c.reshape(Cout, N, OH, OW).transpose(1, 0, 2, 3)
    return out


if __name__ == "__main__":
    key = jax.random.PRNGKey(0)
    kx, kw, kb = jax.random.split(key, 3)

    # input matching the module: x1 = torch.randn(1, 5, 32, 32)
    N, Cin, H, W = 1, 5, 32, 32
    Cout, KH, KW = 4, 3, 3
    x1 = jax.random.normal(kx, (N, Cin, H, W), dtype=jnp.float32)

    # deterministic param init (PyTorch-style uniform(-1/sqrt(fan_in), ...))
    fan_in = Cin * KH * KW
    bound = 1.0 / np.sqrt(fan_in)
    weight = jax.random.uniform(kw, (Cout, Cin, KH, KW), dtype=jnp.float32,
                                minval=-bound, maxval=bound)
    bias = jax.random.uniform(kb, (Cout,), dtype=jnp.float32,
                              minval=-bound, maxval=bound)

    out = conv2d_pallas(x1, weight, bias, stride=3, padding=3, dilation=1)
    out = jax.block_until_ready(out)

    # reference check against XLA conv (same semantics, groups=1)
    ref = lax.conv_general_dilated(
        x1, weight, window_strides=(3, 3), padding=[(3, 3), (3, 3)],
        rhs_dilation=(1, 1),
        dimension_numbers=("NCHW", "OIHW", "NCHW"),
    ) + bias.reshape(1, Cout, 1, 1)
    ref = jax.block_until_ready(ref)

    assert out.shape == (1, 4, 12, 12), out.shape
    np.testing.assert_allclose(np.asarray(out), np.asarray(ref),
                               rtol=1e-5, atol=1e-5)
    print("KERNEL_OK")
</pallas_src>

<mosaic_0001>
module attributes {stable_mosaic.version = 11 : i64} {
  func.func @_conv_gemm_kernel(%arg0: memref<72x144xf32, #tpu.memory_space<vmem>>, %arg1: memref<8x72xf32, #tpu.memory_space<vmem>>, %arg2: memref<8x1xf32, #tpu.memory_space<vmem>>, %arg3: memref<8x144xf32, #tpu.memory_space<vmem>>) attributes {dimension_semantics = [], scalar_prefetch = 0 : i64, scratch_operands = 0 : i64, tpu.core_type = #tpu.core_type<tc>} {
    %c0 = arith.constant 0 : index
    %c0_0 = arith.constant 0 : index
    %0 = vector.load %arg1[%c0, %c0_0] : memref<8x72xf32, #tpu.memory_space<vmem>>, vector<8x72xf32>
    %c0_1 = arith.constant 0 : index
    %c0_2 = arith.constant 0 : index
    %1 = vector.load %arg0[%c0_1, %c0_2] : memref<72x144xf32, #tpu.memory_space<vmem>>, vector<72x144xf32>
    %cst = arith.constant dense<0.000000e+00> : vector<8x144xf32>
    %2 = tpu.matmul %0, %1, %cst {dimension_numbers = #tpu.dot_dimension_numbers<[1], [0], [0], [1], [0, 0, 1, 1], [], []>} : vector<8x72xf32>, vector<72x144xf32>, vector<8x144xf32> -> vector<8x144xf32>
    %c0_3 = arith.constant 0 : index
    %c0_4 = arith.constant 0 : index
    %3 = vector.load %arg2[%c0_3, %c0_4] : memref<8x1xf32, #tpu.memory_space<vmem>>, vector<8x1xf32>
    %4 = vector.broadcast %3 : vector<8x1xf32> to vector<8x144xf32>
    %5 = arith.addf %2, %4 : vector<8x144xf32>
    %c0_5 = arith.constant 0 : index
    %c0_6 = arith.constant 0 : index
    %6 = vector.load %arg3[%c0_5, %c0_6] : memref<8x144xf32, #tpu.memory_space<vmem>>, vector<8x144xf32>
    tpu.vector_store %arg3[%c0_5, %c0_6], %5 {strides = array<i32>} : memref<8x144xf32, #tpu.memory_space<vmem>>, vector<8x144xf32>,
    return
  }
}

</mosaic_0001>

<llo_original>
// kernel: conv2d_pallas.1
$region0: #{conv2d_pallas.1}
  #allocation0 [shape = 'u32[]', space=smem, size = 0x4, offset = 0x4, fixed_abs, tag = 'smem constant byte address 0x4 - core index']
  #allocation1 [shape = 'u32[144,128]{1,0:T(1,128)}', space=vmem, size = 0x12000, scoped, tag = 'internal scratch']
  %s0 = inlined_call_operand.vmem [shape: f32[72,144], index: 0, kind: input, shape index: {}]
  %s1 = inlined_call_operand.vmem [shape: f32[8,72], index: 1, kind: input, shape index: {}]
  %s2 = inlined_call_operand.vmem [shape: f32[8,1], index: 2, kind: input, shape index: {}]
  %s3 = inlined_call_operand.vmem [shape: f32[8,144], index: 3, kind: output, shape index: {}]
  %s4 = sld [smem:[#allocation0]]
  $region22: #{conv2d_pallas.1} parent=0
    _
  %s6 = ssub.s32 1, %s4
  %s7 = scalar_select 0, %s6, %s4
  // Predicated region
  $region2: #{conv2d_pallas.1} parent=0 // pred_check
    _
  $region3: #{conv2d_pallas.1} parent=0 // pred_check_branch
    %9 = sbr.rel (0) target = $region5
  $region4: #{conv2d_pallas.1} parent=0 // pred_region
    _
  $region5: #{conv2d_pallas.1} parent=0 // pred_fallthru
    _
  // Predicated region
  $region6: #{conv2d_pallas.1} parent=0 // pred_check
    _
  $region7: #{conv2d_pallas.1} parent=0 // pred_check_branch
    %11 = sbr.rel (0) target = $region9
  $region8: #{conv2d_pallas.1} parent=0 // pred_region
    _
  $region9: #{conv2d_pallas.1} parent=0 // pred_fallthru
    _
  // Predicated region
  $region10: #{conv2d_pallas.1} parent=0 // pred_check
    _
  $region11: #{conv2d_pallas.1} parent=0 // pred_check_branch
    %13 = sbr.rel (0) target = $region13
  $region12: #{conv2d_pallas.1} parent=0 // pred_region
    _
  $region13: #{conv2d_pallas.1} parent=0 // pred_fallthru
    _
  %v14 = vld [vmem:[%s1] sm:$0xff]
  %v15 = vld [vmem:[%s0] sm:$0xff]
  %v16 = vld [vmem:[%s0 + $0x8] sm:$0xff]
  %v17 = vld [vmem:[%s0 + $0x10] sm:$0xff]
  %v18 = vld [vmem:[%s0 + $0x18] sm:$0xff]
  %v19 = vld [vmem:[%s0 + $0x20] sm:$0xff]
  %v20 = vld [vmem:[%s0 + $0x28] sm:$0xff]
  %v21 = vld [vmem:[%s0 + $0x30] sm:$0xff]
  %v22 = vld [vmem:[%s0 + $0x38] sm:$0xff]
  %v23 = vld [vmem:[%s0 + $0x40] sm:$0xff]
  %v24 = vld [vmem:[%s0 + $0x48] sm:$0xff]
  %v25 = vld [vmem:[%s0 + $0x50] sm:$0xff]
  %v26 = vld [vmem:[%s0 + $0x58] sm:$0xff]
  %v27 = vld [vmem:[%s0 + $0x60] sm:$0xff]
  %v28 = vld [vmem:[%s0 + $0x68] sm:$0xff]
  %v29 = vld [vmem:[%s0 + $0x70] sm:$0xff]
  %v30 = vld [vmem:[%s0 + $0x78] sm:$0xff]
  %v31 = vld [vmem:[%s0 + $0x80] sm:$0xff]
  %v32 = vld [vmem:[%s0 + $0x88] sm:$0xff]
  %v33 = vld [vmem:[%s2] sm:$0xff]
  %35 = vset.pattern.permute.xlu0 0
  %36 = vperm.xlu0 %35, %v33
  %v37 = vpop.permute.xlu0 %36
  %vm39 = vcmask 588800
  %v41 = vsel %vm39, %v14, 0
  %43 = vmatprep.subr.mxu0 0.0
  %44 = vmatpush1.msra.mxu0 0.0
  %45 = vmatprep.subr.mxu0 0.0
  %46 = vmatpush1.msra.mxu0 0.0
  %47 = vmatprep.subr.mxu0 0.0
  %48 = vmatpush1.msra.mxu0 0.0
  %49 = vmatprep.subr.mxu0 0.0
  %50 = vmatpush1.msra.mxu0 0.0
  %51 = vmatprep.subr.mxu0 0.0
  %52 = vmatpush1.msra.mxu0 0.0
  %53 = vmatprep.subr.mxu0 0.0
  %54 = vmatpush1.msra.mxu0 0.0
  %55 = vmatprep.subr.mxu0 0.0
  %56 = vmatpush1.msra.mxu0 0.0
  %57 = vmatprep.subr.mxu0 %v32
  %58 = vmatpush1.msra.mxu0 %v31
  %59 = vmatprep.subr.mxu0 %v30
  %60 = vmatpush1.msra.mxu0 %v29
  %61 = vmatprep.subr.mxu0 %v28
  %62 = vmatpush1.msra.mxu0 %v27
  %63 = vmatprep.subr.mxu0 %v26
  %64 = vmatpush1.msra.mxu0 %v25
  %65 = vmatprep.subr.mxu0 %v24
  %66 = vmatpush1.msra.mxu0 %v23
  %67 = vmatprep.subr.mxu0 %v22
  %68 = vmatpush1.msra.mxu0 %v21
  %69 = vmatprep.subr.mxu0 %v20
  %70 = vmatpush1.msra.mxu0 %v19
  %71 = vmatprep.subr.mxu0 %v18
  %72 = vmatpush1.msra.mxu0 %v17
  %73 = vmatprep.subr.mxu0 %v16
  %74 = vmatpush1.msra.mxu0 %v15
  %75 = vmatprep.subr.mxu0 0.0
  %76 = vmatpush2.msra.mxu0 0.0
  %77 = vmatprep.subr.mxu0 0.0
  %78 = vmatpush2.msra.mxu0 0.0
  %79 = vmatprep.subr.mxu0 0.0
  %80 = vmatpush2.msra.mxu0 0.0
  %81 = vmatprep.subr.mxu0 0.0
  %82 = vmatpush2.msra.mxu0 0.0
  %83 = vmatprep.subr.mxu0 0.0
  %84 = vmatpush2.msra.mxu0 0.0
  %85 = vmatprep.subr.mxu0 0.0
  %86 = vmatpush2.msra.mxu0 0.0
  %87 = vmatprep.subr.mxu0 0.0
  %88 = vmatpush2.msra.mxu0 0.0
  %89 = vmatprep.subr.mxu0 0.0
  %90 = vmatpush2.msra.mxu0 0.0
  %91 = vmatprep.subr.mxu0 0.0
  %92 = vmatpush2.msra.mxu0 0.0
  %93 = vmatprep.subr.mxu0 0.0
  %94 = vmatpush2.msra.mxu0 0.0
  %95 = vmatprep.subr.mxu0 0.0
  %96 = vmatpush2.msra.mxu0 0.0
  %97 = vmatprep.subr.mxu0 0.0
  %98 = vmatpush2.msra.mxu0 0.0
  %99 = vmatprep.subr.mxu0 0.0
  %100 = vmatpush2.msra.mxu0 0.0
  %101 = vmatprep.subr.mxu0 0.0
  %102 = vmatpush2.msra.mxu0 0.0
  %103 = vmatprep.subr.mxu0 0.0
  %104 = vmatpush2.msra.mxu0 0.0
  %105 = vmatprep.subr.mxu0 0.0
  %106 = vmatpush2.msra.mxu0 0.0
  %107 = vmatprep.mubr.f32.mxu0 0.0
  %108 = vmatmul.mubr.f32.gmra.mxu0 %v41
  %v109 = vpop.f32.mrf.mxu0
  %v110 = vadd.f32 %v37, %v109
  %v111 = vpop.f32.mrf.mxu0
  %v112 = vadd.f32 %v37, %v111
  %113 = vdwg.mxu0
  %114 = vst [vmem:[%s3] sm:$0xff] %v110
  %vm115 = vcmask 130048
  %116 = vst.msk [vmem:[%s3 + $0x8] sm:$0xff] %vm115, %v112
  // Predicated region
  $region14: #{conv2d_pallas.1} parent=0 // pred_check
    _
  $region15: #{conv2d_pallas.1} parent=0 // pred_check_branch
    %118 = sbr.rel (0) target = $region17
  $region16: #{conv2d_pallas.1} parent=0 // pred_region
    _
  $region17: #{conv2d_pallas.1} parent=0 // pred_fallthru
    _
  // Predicated region
  $region18: #{conv2d_pallas.1} parent=0 // pred_check
    _
  $region19: #{conv2d_pallas.1} parent=0 // pred_check_branch
    %120 = sbr.rel (0) target = $region21
  $region20: #{conv2d_pallas.1} parent=0 // pred_region
    _
  $region21: #{conv2d_pallas.1} parent=0 // pred_fallthru
    _

</llo_original>
